<compile_context>
chip_gen: v6e
topology: v6e:2x2x1
jax: 0.10.0
libtpu: 0.0.40
codegen_flags: <defaults>
</compile_context>

<pallas_src>
import functools
import math

import jax
import jax.numpy as jnp
from jax.experimental import pallas as pl
from jax.experimental.pallas import tpu as pltpu


def _round_up(x, m):
    return ((x + m - 1) // m) * m


def _tpu_vmem_capacity_bytes():
    """Per-core physical VMEM; conservative fallback if the query fails."""
    try:
        cap = int(pltpu.get_tpu_info().vmem_capacity_bytes)
        if cap > 0:
            return cap
    except Exception:
        pass
    return 64 * 1024 * 1024  # v7x has the smallest VMEM of v5e/v6e/v7x


def _bf16_activations_ok():
    """bf16 VPU/EUP exists on v6e/v7x; v5e and older lack it."""
    try:
        kind = jax.devices()[0].device_kind.lower()
    except Exception:
        return False
    return ("v6" in kind) or ("v7" in kind)


def _glimpse_kernel(encs_ref, wt_ref, b_ref, v_ref, out_ref, *, act_dtype):
    # encs_ref : (TB, L, D)  input dtype (f32 or bf16)
    # wt_ref   : (D, Up)     bf16  (already transposed + lane-padded W.T)
    # b_ref    : (1, Up)     f32
    # v_ref    : (1, Up)     f32
    # out_ref  : (TB, D)     encs dtype
    x = encs_ref[...]                                     # [TB, L, D]
    tb, L, D = x.shape
    Up = wt_ref.shape[1]

    # Position-wise projection (conv1d kernel_size=1) as one MXU matmul,
    # bf16 inputs / f32 accumulation.  Weight is pre-cast in the wrapper.
    x2 = x.reshape(tb * L, D)
    enc = jnp.dot(x2.astype(jnp.bfloat16), wt_ref[...],
                  preferred_element_type=jnp.float32)      # [TB*L, Up]
    enc = enc + b_ref[...]

    # scores[b, l] = sum_u v[u] * tanh(enc[b, l, u])
    # tanh in bf16 on chips with a bf16 EUP (v6e/v7x); f32 accumulation of
    # the lane reduce either way.  Padded U columns are exactly zero.
    t = jnp.tanh(enc.astype(act_dtype))                    # [TB*L, Up]
    prod = t * v_ref[...].astype(act_dtype)
    scores = jnp.sum(prod.astype(jnp.float32).reshape(tb, L, Up),
                     axis=-1)                              # [TB, L] (L on lanes)

    # Numerically stable softmax over the sequence (lane) axis.
    m = jnp.max(scores, axis=-1, keepdims=True)            # [TB, 1]
    e = jnp.exp(scores - m)                                 # [TB, L]
    denom = jnp.sum(e, axis=-1, keepdims=True)              # [TB, 1]
    attn = e * pl.reciprocal(denom, approx=True)            # [TB, L]

    # glimpse[b, d] = sum_l attn[b, l] * x[b, l, d]  -> batched MXU contraction
    # (attn has L on lanes = MXU LHS K-axis; x has L on sublanes = RHS K-axis,
    #  so no relayout is needed; cost is hidden under the encs DMA).
    g = jnp.einsum("bql,bld->bqd",
                   attn.reshape(tb, 1, L).astype(x.dtype), x,
                   preferred_element_type=jnp.float32)       # [TB, 1, D]
    out_ref[...] = g.reshape(tb, D).astype(out_ref.dtype)


def glimpse_forward(encs, w, b, v, *, block_b=None):
    """encs: [B, L, d_model] (f32 or bf16); w: [d_unit, d_model]; b, v: [d_unit]."""
    B, L, D = encs.shape
    U = w.shape[0]
    out_dtype = encs.dtype
    in_itemsize = jnp.dtype(encs.dtype).itemsize

    # --- Parameter prep (hoisted out of the kernel) -------------------------
    # Lane-pad d_unit to a multiple of 128: zero columns of W.T / zeros in b, v
    # contribute tanh(0)*0 = 0 to the scores -> semantics unchanged, but the
    # matmul N dim, tanh pass and lane reduce become lane-dense.
    Up = _round_up(U, 128)
    wt = jnp.transpose(w).astype(jnp.float32)               # [D, U]
    b_f = b.astype(jnp.float32)
    v_f = v.astype(jnp.float32)
    if Up != U:
        wt = jnp.pad(wt, ((0, 0), (0, Up - U)))
        b_f = jnp.pad(b_f, (0, Up - U))
        v_f = jnp.pad(v_f, (0, Up - U))
    wt = wt.astype(jnp.bfloat16)                             # pre-cast once
    b2 = b_f.reshape(1, Up)
    v2 = v_f.reshape(1, Up)

    # --- VMEM accounting & batch-tile selection -----------------------------
    vmem_cap = _tpu_vmem_capacity_bytes()
    per_row = (2 * L * D * in_itemsize   # double-buffered encs input block
               + L * D * 2               # bf16 cast of the flattened block
               + 2 * L * Up * 4          # enc + tanh(enc) f32 temporaries
               + L * D * 4               # weighted-sum / einsum temporaries
               + 2 * D * 4)              # double-buffered output row
    fixed = (2 * D * Up * 2              # double-buffered bf16 weight block
             + 4 * Up * 4                # b and v blocks
             + (1 << 20))                # compiler scratch slack
    budget = int(vmem_cap * 0.55)        # headroom below physical capacity

    if block_b is not None:
        tb = max(1, min(int(block_b), B))
    else:
        tb = max(1, (budget - fixed) // per_row)
        tb = min(tb, B)

    if tb >= B:
        if B >= 16 and block_b is None:
            # Force >=2 grid steps so ("parallel",) can shard the batch axis
            # across v7x's two TensorCores (each half keeps >=8 real rows).
            tb = _round_up(pl.cdiv(B, 2), 8)
        else:
            tb = B                       # single step: block == full batch
    else:
        # Multi-step grid: (TB, D) output block needs TB % 8 == 0.
        tb = max(8, (tb // 8) * 8)

    est = fixed + tb * per_row
    if est > int(vmem_cap * 0.9):
        # TODO(synk): add L-axis tiling (second "arbitrary" grid dim with an
        # online/two-pass softmax + f32 accumulator scratch) for sequences
        # whose minimal legal batch block does not fit VMEM.
        raise ValueError(
            f"Glimpse block (tb={tb}, L={L}, D={D}) needs ~{est >> 20} MiB "
            f"VMEM, exceeding this TPU's {vmem_cap >> 20} MiB; reduce block_b "
            f"or add L-tiling.")
    vmem_limit = int(min(vmem_cap, max(est + (8 << 20), 32 << 20)))

    Bp = pl.cdiv(B, tb) * tb
    encs_p = encs if Bp == B else jnp.pad(encs, ((0, Bp - B), (0, 0), (0, 0)))

    act_dtype = jnp.bfloat16 if _bf16_activations_ok() else jnp.float32
    kernel = functools.partial(_glimpse_kernel, act_dtype=act_dtype)

    out = pl.pallas_call(
        kernel,
        out_shape=jax.ShapeDtypeStruct((Bp, D), out_dtype),
        grid_spec=pl.GridSpec(
            grid=(Bp // tb,),
            in_specs=[
                pl.BlockSpec((tb, L, D), lambda i: (i, 0, 0)),
                pl.BlockSpec((D, Up), lambda i: (0, 0)),
                pl.BlockSpec((1, Up), lambda i: (0, 0)),
                pl.BlockSpec((1, Up), lambda i: (0, 0)),
            ],
            out_specs=pl.BlockSpec((tb, D), lambda i: (i, 0)),
        ),
        compiler_params=pltpu.CompilerParams(
            dimension_semantics=("parallel",),
            vmem_limit_bytes=vmem_limit),
    )(encs_p, wt, b2, v2)
    return out[:B]


def glimpse_reference(encs, w, b, v):
    encoded = jnp.einsum("bld,ud->blu", encs.astype(jnp.float32),
                         w.astype(jnp.float32)) + b
    scores = jnp.sum(v * jnp.tanh(encoded), axis=-1)
    attn = jax.nn.softmax(scores, axis=-1)
    return jnp.sum(attn[..., None] * encs.astype(jnp.float32), axis=1)


if __name__ == "__main__":
    B, L, d_model, d_unit = 2, 8, 32, 16

    key = jax.random.PRNGKey(0)
    k_enc, k_w, k_b, k_v = jax.random.split(key, 4)

    encs = jax.random.normal(k_enc, (B, L, d_model), dtype=jnp.float32)

    # Deterministic parameter init mirroring nn.Conv1d / the uniform v init.
    w_bound = 1.0 / math.sqrt(d_model)
    v_bound = 1.0 / math.sqrt(d_unit)
    w = jax.random.uniform(k_w, (d_unit, d_model), jnp.float32, -w_bound, w_bound)
    b = jax.random.uniform(k_b, (d_unit,), jnp.float32, -w_bound, w_bound)
    v = jax.random.uniform(k_v, (d_unit,), jnp.float32, -v_bound, v_bound)

    out = glimpse_forward(encs, w, b, v)
    out = jax.block_until_ready(out)

    ref = glimpse_reference(encs, w, b, v)
    assert out.shape == (B, d_model)
    # bf16 projection/tanh + approx reciprocal shift numerics slightly vs the
    # pure f32 reference; tolerance relaxed accordingly (inference use).
    assert jnp.allclose(out, ref, atol=2e-2, rtol=2e-2), "mismatch vs reference"

    print("KERNEL_OK")
</pallas_src>

<mosaic_0001>
module attributes {stable_mosaic.version = 11 : i64} {
  func.func @_glimpse_kernel(%arg0: i32, %arg1: memref<2x8x32xf32, #tpu.memory_space<vmem>>, %arg2: memref<32x128xbf16, #tpu.memory_space<vmem>>, %arg3: memref<1x128xf32, #tpu.memory_space<vmem>>, %arg4: memref<1x128xf32, #tpu.memory_space<vmem>>, %arg5: memref<2x32xf32, #tpu.memory_space<vmem>>) attributes {dimension_semantics = [#tpu.dimension_semantics<parallel>], iteration_bounds = array<i64: 1>, scalar_prefetch = 0 : i64, scratch_operands = 0 : i64, tpu.core_type = #tpu.core_type<tc>, window_params = [{transform_indices = @transform_0, window_bounds = array<i64: 2, 8, 32>}, {pipeline_mode = #tpu.pipeline_mode<synchronous>, transform_indices = @transform_1, window_bounds = array<i64: 32, 128>}, {pipeline_mode = #tpu.pipeline_mode<synchronous>, transform_indices = @transform_2, window_bounds = array<i64: 1, 128>}, {pipeline_mode = #tpu.pipeline_mode<synchronous>, transform_indices = @transform_3, window_bounds = array<i64: 1, 128>}, {transform_indices = @transform_4, window_bounds = array<i64: 2, 32>}]} {
    %c0 = arith.constant 0 : index
    %c0_0 = arith.constant 0 : index
    %c0_1 = arith.constant 0 : index
    %0 = vector.load %arg1[%c0, %c0_0, %c0_1] : memref<2x8x32xf32, #tpu.memory_space<vmem>>, vector<2x8x32xf32>
    %1 = vector.shape_cast %0 : vector<2x8x32xf32> to vector<16x32xf32>
    %2 = arith.truncf %1 : vector<16x32xf32> to vector<16x32xbf16>
    %c0_2 = arith.constant 0 : index
    %c0_3 = arith.constant 0 : index
    %3 = vector.load %arg2[%c0_2, %c0_3] : memref<32x128xbf16, #tpu.memory_space<vmem>>, vector<32x128xbf16>
    %cst = arith.constant dense<0.000000e+00> : vector<16x128xf32>
    %4 = tpu.matmul %2, %3, %cst {dimension_numbers = #tpu.dot_dimension_numbers<[1], [0], [0], [1], [0, 0, 1, 1], [], []>} : vector<16x32xbf16>, vector<32x128xbf16>, vector<16x128xf32> -> vector<16x128xf32>
    %c0_4 = arith.constant 0 : index
    %c0_5 = arith.constant 0 : index
    %5 = vector.load %arg3[%c0_4, %c0_5] : memref<1x128xf32, #tpu.memory_space<vmem>>, vector<1x128xf32>
    %6 = vector.broadcast %5 : vector<1x128xf32> to vector<16x128xf32>
    %7 = arith.addf %4, %6 : vector<16x128xf32>
    %8 = math.tanh %7 : vector<16x128xf32>
    %c0_6 = arith.constant 0 : index
    %c0_7 = arith.constant 0 : index
    %9 = vector.load %arg4[%c0_6, %c0_7] : memref<1x128xf32, #tpu.memory_space<vmem>>, vector<1x128xf32>
    %10 = vector.broadcast %9 : vector<1x128xf32> to vector<16x128xf32>
    %11 = arith.mulf %8, %10 : vector<16x128xf32>
    %12 = vector.shape_cast %11 : vector<16x128xf32> to vector<2x8x128xf32>
    %cst_8 = arith.constant dense<0.000000e+00> : vector<2x8xf32>
    %13 = vector.multi_reduction <add>, %12, %cst_8 [2] : vector<2x8x128xf32> to vector<2x8xf32>
    %cst_9 = arith.constant dense<0xFF800000> : vector<2xf32>
    %14 = vector.multi_reduction <maximumf>, %13, %cst_9 [1] : vector<2x8xf32> to vector<2xf32>
    %15 = vector.shape_cast %14 : vector<2xf32> to vector<2x1xf32>
    %16 = vector.broadcast %15 : vector<2x1xf32> to vector<2x8xf32>
    %17 = arith.subf %13, %16 : vector<2x8xf32>
    %18 = math.exp %17 : vector<2x8xf32>
    %cst_10 = arith.constant dense<0.000000e+00> : vector<2xf32>
    %19 = vector.multi_reduction <add>, %18, %cst_10 [1] : vector<2x8xf32> to vector<2xf32>
    %20 = vector.shape_cast %19 : vector<2xf32> to vector<2x1xf32>
    %21 = tpu.reciprocal %20 {approx = true} : vector<2x1xf32> -> vector<2x1xf32>
    %22 = vector.broadcast %21 : vector<2x1xf32> to vector<2x8xf32>
    %23 = arith.mulf %18, %22 : vector<2x8xf32>
    %24 = vector.shape_cast %23 : vector<2x8xf32> to vector<2x1x8xf32>
    "tpu.trace_start"() <{level = 10 : i32, message = "bql,bld->bqd"}> : () -> ()
    %cst_11 = arith.constant dense<0.000000e+00> : vector<2x1x32xf32>
    %25 = tpu.matmul %24, %0, %cst_11 {dimension_numbers = #tpu.dot_dimension_numbers<[2], [1], [1], [2], [0, 0, 0, 1, 1, 2], [0], [0]>} : vector<2x1x8xf32>, vector<2x8x32xf32>, vector<2x1x32xf32> -> vector<2x1x32xf32>
    "tpu.trace_stop"() : () -> ()
    %26 = vector.shape_cast %25 : vector<2x1x32xf32> to vector<2x32xf32>
    %c0_12 = arith.constant 0 : index
    %c0_13 = arith.constant 0 : index
    %27 = vector.load %arg5[%c0_12, %c0_13] : memref<2x32xf32, #tpu.memory_space<vmem>>, vector<2x32xf32>
    tpu.vector_store %arg5[%c0_12, %c0_13], %26 {strides = array<i32>} : memref<2x32xf32, #tpu.memory_space<vmem>>, vector<2x32xf32>,
    return
  }
  func.func @transform_0(%arg0: i32) -> (i32, i32, i32) {
    %c0_i32 = arith.constant 0 : i32
    %c0_i32_0 = arith.constant 0 : i32
    %c0_i32_1 = arith.constant 0 : i32
    return %arg0, %c0_i32, %c0_i32_0 : i32, i32, i32
  }
  func.func @transform_1(%arg0: i32) -> (i32, i32) {
    %c0_i32 = arith.constant 0 : i32
    %c0_i32_0 = arith.constant 0 : i32
    %c0_i32_1 = arith.constant 0 : i32
    return %c0_i32, %c0_i32_0 : i32, i32
  }
  func.func @transform_2(%arg0: i32) -> (i32, i32) {
    %c0_i32 = arith.constant 0 : i32
    %c0_i32_0 = arith.constant 0 : i32
    %c0_i32_1 = arith.constant 0 : i32
    return %c0_i32, %c0_i32_0 : i32, i32
  }
  func.func @transform_3(%arg0: i32) -> (i32, i32) {
    %c0_i32 = arith.constant 0 : i32
    %c0_i32_0 = arith.constant 0 : i32
    %c0_i32_1 = arith.constant 0 : i32
    return %c0_i32, %c0_i32_0 : i32, i32
  }
  func.func @transform_4(%arg0: i32) -> (i32, i32) {
    %c0_i32 = arith.constant 0 : i32
    %c0_i32_0 = arith.constant 0 : i32
    return %arg0, %c0_i32 : i32, i32
  }
}

</mosaic_0001>

<llo_original>
// kernel: tpu_custom_call.1
$region0: #{tpu_custom_call.1}
  #allocation0 [shape = 'u32[]', space=smem, size = 0x4, offset = 0x4, fixed_abs, tag = 'smem constant byte address 0x4 - core index']
  #allocation1 [shape = 'u32[144,128]{1,0:T(1,128)}', space=vmem, size = 0x12000, scoped, tag = 'internal scratch']
  %s0 = inlined_call_operand.hbm [shape: f32[2,8,32], index: 0, kind: input, shape index: {}]
  %s1 = inlined_call_operand.hbm [shape: bf16[32,128], index: 1, kind: input, shape index: {}]
  %s2 = inlined_call_operand.vmem [shape: f32[1,128], index: 2, kind: input, shape index: {}]
  %s3 = inlined_call_operand.vmem [shape: f32[1,128], index: 3, kind: input, shape index: {}]
  %s4 = inlined_call_operand.hbm [shape: f32[2,32], index: 4, kind: output, shape index: {}]
  %s5 = sld [smem:[#allocation0]]
  $region34: #{tpu_custom_call.1} parent=0
    _
  %s7 = ssub.s32 1, %s5
  %s8 = scalar_select 0, %s7, %s5
  $region1: #{tpu_custom_call.1} parent=0
    #allocation2 [shape = 'u8[8192]{0}', space=vmem, size = 0x2000, scoped, tag = 'input window, operand 0, single buffered']
    #allocation3 [shape = 's32[1]{0}', space=sflag, size = 0x4, scoped, tag = 'scoped memory for tpu_custom_call.1']
    #allocation4 [shape = 's32[1]{0}', space=sflag, size = 0x4, scoped, tag = 'scoped memory for tpu_custom_call.1']
    #allocation5 [shape = 'u8[8192]{0}', space=vmem, size = 0x2000, scoped, tag = 'input window, operand 1, single buffered']
    #allocation6 [shape = 's32[1]{0}', space=sflag, size = 0x4, scoped, tag = 'scoped memory for tpu_custom_call.1']
    #allocation7 [shape = 'u8[1024]{0}', space=vmem, size = 0x400, scoped, tag = 'output window, operand 0, single buffered']
    %9 = vsyncpa [#allocation3], 0
    %10 = vsyncpa [#allocation6], 0
    %11 = vsyncpa [#allocation4], 0
    // Predicated region
    $region2: #{tpu_custom_call.1} parent=1 // pred_check
      _
    $region3: #{tpu_custom_call.1} parent=1 // pred_check_branch
      %13 = sbr.rel (0) target = $region5
    $region4: #{tpu_custom_call.1} parent=1 // pred_region
      %s15 = ssub.s32 256, 256
      %16 = vsyncadd [#allocation3], %s15
      %s17 = sshll.u32 [#allocation2], 4
      %s18 = int_to_ptr.vmem [resolvable:$true] %s17
      %23 = dma.hbm_to_vmem [thread:$0]  %s0, 256, %s18, [#allocation3], 128, 128, 8
    $region5: #{tpu_custom_call.1} parent=1 // pred_fallthru
      _
    // Predicated region
    $region6: #{tpu_custom_call.1} parent=1 // pred_check
      _
    $region7: #{tpu_custom_call.1} parent=1 // pred_check_branch
      %25 = sbr.rel (0) target = $region9
    $region8: #{tpu_custom_call.1} parent=1 // pred_region
      %s27 = ssub.s32 256, 256
      %28 = vsyncadd [#allocation6], %s27
      %s29 = sshll.u32 [#allocation5], 4
      %s30 = int_to_ptr.vmem [resolvable:$true] %s29
      %35 = dma.hbm_to_vmem [thread:$0]  %s1, 256, %s30, [#allocation6], 64, 64, 4
    $region9: #{tpu_custom_call.1} parent=1 // pred_fallthru
      _
    // Predicated region
    $region10: #{tpu_custom_call.1} parent=1 // pred_check
      _
    $region11: #{tpu_custom_call.1} parent=1 // pred_check_branch
      %37 = sbr.rel (0) target = $region13
    $region12: #{tpu_custom_call.1} parent=1 // pred_region
      _
    $region13: #{tpu_custom_call.1} parent=1 // pred_fallthru
      _
    // Predicated region
    $region14: #{tpu_custom_call.1} parent=1 // pred_check
      _
    $region15: #{tpu_custom_call.1} parent=1 // pred_check_branch
      %39 = sbr.rel (0) target = $region17
    $region16: #{tpu_custom_call.1} parent=1 // pred_region
      _
    $region17: #{tpu_custom_call.1} parent=1 // pred_fallthru
      _
    // Predicated region
    $region18: #{tpu_custom_call.1} parent=1 // pred_check
      _
    $region19: #{tpu_custom_call.1} parent=1 // pred_check_branch
      %41 = sbr.rel (0) target = $region21
    $region20: #{tpu_custom_call.1} parent=1 // pred_region
      %42 = dma.done [#allocation3], 256
    $region21: #{tpu_custom_call.1} parent=1 // pred_fallthru
      _
    // Predicated region
    $region22: #{tpu_custom_call.1} parent=1 // pred_check
      _
    $region23: #{tpu_custom_call.1} parent=1 // pred_check_branch
      %44 = sbr.rel (0) target = $region25
    $region24: #{tpu_custom_call.1} parent=1 // pred_region
      %45 = dma.done [#allocation6], 256
    $region25: #{tpu_custom_call.1} parent=1 // pred_fallthru
      _
    %v47 = vld [vmem:[#allocation2] sm:$0xff]
    %v48 = vld [vmem:[#allocation2 + $0x8] sm:$0xff]
    %v49 = vpack.c.bf16 %v48, %v47
    %v50 = vld [vmem:[#allocation5] sm:$0xf]
    %v51 = vld [vmem:[#allocation5 + $0x4] sm:$0xf]
    %v52 = vld [vmem:[#allocation5 + $0x8] sm:$0xf]
    %v53 = vld [vmem:[#allocation5 + $0xc] sm:$0xf]
    %v54 = vld [vmem:[%s2] sm:$0x1]
    %v56 = vlaneseq
    %v57 = vshrl.u32 %v56, 7
    %v58 = vsub.s32 0, %v57
    %v59 = vrot.slane %v54, %v58
    %v65 = vunpack.c.l.b16 %v50
    %v66 = vunpack.c.l.b16 %v51
    %v67 = vunpack.c.l.b16 %v52
    %v68 = vunpack.c.l.b16 %v53
    %v69 = vpack.c.b16 %v66, %v65
    %v70 = vpack.c.b16 %v68, %v67
    %vm73 = vcmask 261120
    %v75 = vsel %vm73, %v49, 0
    %77 = vmatprep.subr.bf16.mxu0 0
    %78 = vmatpush1.bf16.msra.mxu0 0
    %79 = vmatprep.subr.bf16.mxu0 0
    %80 = vmatpush1.bf16.msra.mxu0 0
    %81 = vmatprep.subr.bf16.mxu0 0
    %82 = vmatpush1.bf16.msra.mxu0 0
    %83 = vmatprep.subr.bf16.mxu0 0
    %84 = vmatpush1.bf16.msra.mxu0 0
    %85 = vmatprep.subr.bf16.mxu0 0
    %86 = vmatpush1.bf16.msra.mxu0 0
    %87 = vmatprep.subr.bf16.mxu0 0
    %88 = vmatpush1.bf16.msra.mxu0 0
    %89 = vmatprep.subr.bf16.mxu0 0
    %90 = vmatpush1.bf16.msra.mxu0 %v70
    %91 = vmatprep.subr.bf16.mxu0 0
    %92 = vmatpush1.bf16.msra.mxu0 %v69
    %93 = vmatprep.subr.bf16.mxu0 0
    %94 = vmatpush2.bf16.msra.mxu0 0
    %95 = vmatprep.subr.bf16.mxu0 0
    %96 = vmatpush2.bf16.msra.mxu0 0
    %97 = vmatprep.subr.bf16.mxu0 0
    %98 = vmatpush2.bf16.msra.mxu0 0
    %99 = vmatprep.subr.bf16.mxu0 0
    %100 = vmatpush2.bf16.msra.mxu0 0
    %101 = vmatprep.subr.bf16.mxu0 0
    %102 = vmatpush2.bf16.msra.mxu0 0
    %103 = vmatprep.subr.bf16.mxu0 0
    %104 = vmatpush2.bf16.msra.mxu0 0
    %105 = vmatprep.subr.bf16.mxu0 0
    %106 = vmatpush2.bf16.msra.mxu0 0
    %107 = vmatprep.subr.bf16.mxu0 0
    %108 = vmatpush2.bf16.msra.mxu0 0
    %109 = vmatprep.mubr.bf16.mxu0 0
    %110 = vmatmul.mubr.bf16.gmra.mxu0 %v75
    %v111 = vpop.f32.mrf.mxu0
    %v112 = vadd.f32 %v59, %v111
    %v113 = vpop.f32.mrf.mxu0
    %v114 = vpop.f32.mrf.mxu0
    %v115 = vadd.f32 %v59, %v114
    %v116 = vpop.f32.mrf.mxu0
    %117 = vdwg.mxu0
    %v118 = vtanh.pop %v112
    %v119 = vtanh.pop %v115
    %v120 = vld [vmem:[%s3] sm:$0x1]
    %v122 = vlaneseq
    %v123 = vshrl.u32 %v122, 7
    %v124 = vsub.s32 0, %v123
    %v125 = vrot.slane %v120, %v124
    %v127 = vmul.f32 %v118, %v125
    %v128 = vmul.f32 %v119, %v125
    %129 = vadd.xlane.f32.xlu0 %v127
    %v130 = vpop.xlane.xlu0 %129
    %131 = vadd.xlane.f32.xlu0 %v128
    %v132 = vpop.xlane.xlu0 %131
    %v135 = vlaneseq
    %v136 = vand.u32 %v135, 127
    %v137 = vlaneseq
    %v138 = vshrl.u32 %v137, 7
    %v139 = vsub.s32 %v136, %v138
    %v140 = vrot.slane %v130, %v139
    %v141 = vlaneseq
    %v142 = vshrl.u32 %v141, 7
    %v143 = vsub.s32 %v136, %v142
    %v144 = vrot.slane %v132, %v143
    %vm145 = vcmask 1041409
    %v146 = vsel %vm145, %v144, %v140
    %vm148 = vcmask 58368
    %v149 = vsel %vm148, %v146, -inf
    %150 = vmax.xlane.f32.xlu0 %v149
    %v151 = vpop.xlane.xlu0 %150
    %v153 = vlaneseq
    %v154 = vshrl.u32 %v153, 7
    %v155 = vsub.s32 0, %v154
    %v156 = vrot.slane %v151, %v155
    %v157 = vlaneseq
    %v158 = vshrl.u32 %v157, 7
    %v159 = vsub.s32 1, %v158
    %v160 = vrot.slane %v151, %v159
    %v163 = vsub.f32 %v130, %v156
    %v164 = vsub.f32 %v132, %v160
    %v165 = vmul.f32 %v163, 1.442695
    %v166 = vpow.pop %v165
    %v167 = vmul.f32 %v164, 1.442695
    %v168 = vpow.pop %v167
    %171 = vset.pattern.permute.xlu0 0
    %172 = vperm.xlu0 %171, %v166
    %v173 = vpop.permute.xlu0 %172
    %174 = vset.pattern.permute.xlu0 0
    %175 = vperm.xlu0 %174, %v168
    %v176 = vpop.permute.xlu0 %175
    %v177 = vlaneseq
    %v178 = vshrl.u32 %v177, 7
    %v179 = vsub.s32 %v136, %v178
    %v180 = vrot.slane %v173, %v179
    %v181 = vlaneseq
    %v182 = vshrl.u32 %v181, 7
    %v183 = vsub.s32 %v136, %v182
    %v184 = vrot.slane %v176, %v183
    %v185 = vsel %vm145, %v184, %v180
    %v187 = vsel %vm148, %v185, 0.0
    %188 = vadd.xlane.f32.xlu0 %v187
    %v189 = vpop.xlane.xlu0 %188
    %v190 = vrcp.pop %v189
    %v192 = vlaneseq
    %v193 = vshrl.u32 %v192, 7
    %v194 = vsub.s32 0, %v193
    %v195 = vrot.slane %v190, %v194
    %v196 = vlaneseq
    %v197 = vshrl.u32 %v196, 7
    %v198 = vsub.s32 1, %v197
    %v199 = vrot.slane %v190, %v198
    %v202 = vmul.f32 %v166, %v195
    %v203 = vmul.f32 %v168, %v199
    %205 = vset.pattern.permute.xlu0 0
    %206 = vperm.xlu0 %205, %v202
    %v207 = vpop.permute.xlu0 %206
    %v208 = vlaneseq
    %v209 = vshrl.u32 %v208, 7
    %v210 = vsub.s32 %v136, %v209
    %v211 = vrot.slane %v207, %v210
    %vm212 = vcmask 64512
    %v213 = vsel %vm212, %v211, 0
    %215 = vmatprep.subr.mxu0 0.0
    %216 = vmatpush1.msra.mxu0 0.0
    %217 = vmatprep.subr.mxu0 0.0
    %218 = vmatpush1.msra.mxu0 0.0
    %219 = vmatprep.subr.mxu0 0.0
    %220 = vmatpush1.msra.mxu0 0.0
    %221 = vmatprep.subr.mxu0 0.0
    %222 = vmatpush1.msra.mxu0 0.0
    %223 = vmatprep.subr.mxu0 0.0
    %224 = vmatpush1.msra.mxu0 0.0
    %225 = vmatprep.subr.mxu0 0.0
    %226 = vmatpush1.msra.mxu0 0.0
    %227 = vmatprep.subr.mxu0 0.0
    %228 = vmatpush1.msra.mxu0 0.0
    %229 = vmatprep.subr.mxu0 0.0
    %230 = vmatpush1.msra.mxu0 0.0
    %231 = vmatprep.subr.mxu0 0.0
    %232 = vmatpush1.msra.mxu0 0.0
    %233 = vmatprep.subr.mxu0 0.0
    %234 = vmatpush1.msra.mxu0 0.0
    %235 = vmatprep.subr.mxu0 0.0
    %236 = vmatpush1.msra.mxu0 0.0
    %237 = vmatprep.subr.mxu0 0.0
    %238 = vmatpush1.msra.mxu0 0.0
    %239 = vmatprep.subr.mxu0 0.0
    %240 = vmatpush1.msra.mxu0 0.0
    %241 = vmatprep.subr.mxu0 0.0
    %242 = vmatpush1.msra.mxu0 0.0
    %243 = vmatprep.subr.mxu0 0.0
    %244 = vmatpush1.msra.mxu0 0.0
    %245 = vmatprep.subr.mxu0 0.0
    %246 = vmatpush1.msra.mxu0 %v47
    %247 = vmatprep.subr.mxu0 0.0
    %248 = vmatpush2.msra.mxu0 0.0
    %249 = vmatprep.subr.mxu0 0.0
    %250 = vmatpush2.msra.mxu0 0.0
    %251 = vmatprep.subr.mxu0 0.0
    %252 = vmatpush2.msra.mxu0 0.0
    %253 = vmatprep.subr.mxu0 0.0
    %254 = vmatpush2.msra.mxu0 0.0
    %255 = vmatprep.subr.mxu0 0.0
    %256 = vmatpush2.msra.mxu0 0.0
    %257 = vmatprep.subr.mxu0 0.0
    %258 = vmatpush2.msra.mxu0 0.0
    %259 = vmatprep.subr.mxu0 0.0
    %260 = vmatpush2.msra.mxu0 0.0
    %261 = vmatprep.subr.mxu0 0.0
    %262 = vmatpush2.msra.mxu0 0.0
    %263 = vmatprep.subr.mxu0 0.0
    %264 = vmatpush2.msra.mxu0 0.0
    %265 = vmatprep.subr.mxu0 0.0
    %266 = vmatpush2.msra.mxu0 0.0
    %267 = vmatprep.subr.mxu0 0.0
    %268 = vmatpush2.msra.mxu0 0.0
    %269 = vmatprep.subr.mxu0 0.0
    %270 = vmatpush2.msra.mxu0 0.0
    %271 = vmatprep.subr.mxu0 0.0
    %272 = vmatpush2.msra.mxu0 0.0
    %273 = vmatprep.subr.mxu0 0.0
    %274 = vmatpush2.msra.mxu0 0.0
    %275 = vmatprep.subr.mxu0 0.0
    %276 = vmatpush2.msra.mxu0 0.0
    %277 = vmatprep.subr.mxu0 0.0
    %278 = vmatpush2.msra.mxu0 0.0
    %279 = vmatprep.mubr.f32.mxu0 0.0
    %280 = vmatmul.mubr.f32.gmra.mxu0 %v213
    %v281 = vpop.f32.mrf.mxu0
    %v282 = vadd.f32 0.0, %v281
    %v283 = vpop.f32.mrf.mxu0
    %284 = vdwg.mxu0
    %286 = vset.pattern.permute.xlu0 0
    %287 = vperm.xlu0 %286, %v203
    %v288 = vpop.permute.xlu0 %287
    %v289 = vlaneseq
    %v290 = vshrl.u32 %v289, 7
    %v291 = vsub.s32 %v136, %v290
    %v292 = vrot.slane %v288, %v291
    %v293 = vsel %vm212, %v292, 0
    %295 = vmatprep.subr.mxu0 0.0
    %296 = vmatpush1.msra.mxu0 0.0
    %297 = vmatprep.subr.mxu0 0.0
    %298 = vmatpush1.msra.mxu0 0.0
    %299 = vmatprep.subr.mxu0 0.0
    %300 = vmatpush1.msra.mxu0 0.0
    %301 = vmatprep.subr.mxu0 0.0
    %302 = vmatpush1.msra.mxu0 0.0
    %303 = vmatprep.subr.mxu0 0.0
    %304 = vmatpush1.msra.mxu0 0.0
    %305 = vmatprep.subr.mxu0 0.0
    %306 = vmatpush1.msra.mxu0 0.0
    %307 = vmatprep.subr.mxu0 0.0
    %308 = vmatpush1.msra.mxu0 0.0
    %309 = vmatprep.subr.mxu0 0.0
    %310 = vmatpush1.msra.mxu0 0.0
    %311 = vmatprep.subr.mxu0 0.0
    %312 = vmatpush1.msra.mxu0 0.0
    %313 = vmatprep.subr.mxu0 0.0
    %314 = vmatpush1.msra.mxu0 0.0
    %315 = vmatprep.subr.mxu0 0.0
    %316 = vmatpush1.msra.mxu0 0.0
    %317 = vmatprep.subr.mxu0 0.0
    %318 = vmatpush1.msra.mxu0 0.0
    %319 = vmatprep.subr.mxu0 0.0
    %320 = vmatpush1.msra.mxu0 0.0
    %321 = vmatprep.subr.mxu0 0.0
    %322 = vmatpush1.msra.mxu0 0.0
    %323 = vmatprep.subr.mxu0 0.0
    %324 = vmatpush1.msra.mxu0 0.0
    %325 = vmatprep.subr.mxu0 0.0
    %326 = vmatpush1.msra.mxu0 %v48
    %327 = vmatprep.subr.mxu0 0.0
    %328 = vmatpush2.msra.mxu0 0.0
    %329 = vmatprep.subr.mxu0 0.0
    %330 = vmatpush2.msra.mxu0 0.0
    %331 = vmatprep.subr.mxu0 0.0
    %332 = vmatpush2.msra.mxu0 0.0
    %333 = vmatprep.subr.mxu0 0.0
    %334 = vmatpush2.msra.mxu0 0.0
    %335 = vmatprep.subr.mxu0 0.0
    %336 = vmatpush2.msra.mxu0 0.0
    %337 = vmatprep.subr.mxu0 0.0
    %338 = vmatpush2.msra.mxu0 0.0
    %339 = vmatprep.subr.mxu0 0.0
    %340 = vmatpush2.msra.mxu0 0.0
    %341 = vmatprep.subr.mxu0 0.0
    %342 = vmatpush2.msra.mxu0 0.0
    %343 = vmatprep.subr.mxu0 0.0
    %344 = vmatpush2.msra.mxu0 0.0
    %345 = vmatprep.subr.mxu0 0.0
    %346 = vmatpush2.msra.mxu0 0.0
    %347 = vmatprep.subr.mxu0 0.0
    %348 = vmatpush2.msra.mxu0 0.0
    %349 = vmatprep.subr.mxu0 0.0
    %350 = vmatpush2.msra.mxu0 0.0
    %351 = vmatprep.subr.mxu0 0.0
    %352 = vmatpush2.msra.mxu0 0.0
    %353 = vmatprep.subr.mxu0 0.0
    %354 = vmatpush2.msra.mxu0 0.0
    %355 = vmatprep.subr.mxu0 0.0
    %356 = vmatpush2.msra.mxu0 0.0
    %357 = vmatprep.subr.mxu0 0.0
    %358 = vmatpush2.msra.mxu0 0.0
    %359 = vmatprep.mubr.f32.mxu0 0.0
    %360 = vmatmul.mubr.f32.gmra.mxu0 %v293
    %v361 = vpop.f32.mrf.mxu0
    %v362 = vadd.f32 0.0, %v361
    %v363 = vpop.f32.mrf.mxu0
    %364 = vdwg.mxu0
    %v367 = vrot.slane %v362, 7
    %v368 = vsel %vm145, %v367, %v282
    %vm370 = vcmask 254976
    %371 = vst.msk [vmem:[#allocation7] sm:$0x3] %vm370, %v368
    // Predicated region
    $region26: #{tpu_custom_call.1} parent=1 // pred_check
      _
    $region27: #{tpu_custom_call.1} parent=1 // pred_check_branch
      %373 = sbr.rel (0) target = $region29
    $region28: #{tpu_custom_call.1} parent=1 // pred_region
      %s375 = ssub.s32 32, 32
      %376 = vsyncadd [#allocation4], %s375
      %s378 = sshll.u32 [#allocation7], 4
      %s379 = int_to_ptr.vmem [resolvable:$true] %s378
      %381 = dma.vmem_to_hbm [thread:$0]  %s379, 32, %s4, [#allocation4]
    $region29: #{tpu_custom_call.1} parent=1 // pred_fallthru
      _
    // Predicated region
    $region30: #{tpu_custom_call.1} parent=1 // pred_check
      _
    $region31: #{tpu_custom_call.1} parent=1 // pred_check_branch
      %383 = sbr.rel (0) target = $region33
    $region32: #{tpu_custom_call.1} parent=1 // pred_region
      %384 = dma.done [#allocation4], 32
    $region33: #{tpu_custom_call.1} parent=1 // pred_fallthru
      _
    %385 = vsyncpa [#allocation3], 1
    %386 = vsyncpa [#allocation6], 1
    %387 = vsyncpa [#allocation4], 1

</llo_original>
